<compile_context>
chip_gen: v6e
topology: v6e:2x2x1
jax: 0.10.0
libtpu: 0.0.40
codegen_flags: <defaults>
</compile_context>

<pallas_src>
import functools

import jax
import jax.numpy as jnp
from jax.experimental import pallas as pl
from jax.experimental.pallas import tpu as pltpu

_MASK_FILL = -1e9  # matches the PyTorch masked_fill value


def _round_up(x, m):
    return ((x + m - 1) // m) * m


def _tile_bytes(rows, cols, itemsize):
    """VMEM footprint of a (rows, cols) slab after (8, 128) layout tiling."""
    sublane = (8 * 4) // max(itemsize, 1)  # sub-32-bit packs along sublanes
    return _round_up(max(rows, 1), sublane) * _round_up(max(cols, 1), 128) * itemsize


def _attn_concepts_kernel(x_ref, w_ref, mask_ref, attn_ref, ctx_ref, *, compute_dtype):
    # x_ref:    (bt, S, D)  native dtype (cast to compute_dtype here)
    # w_ref:    (K, D)      compute dtype
    # mask_ref: (bt, 1, S)  f32 (nonzero = keep)
    # attn_ref: (bt, K, S)  f32 out
    # ctx_ref:  (bt, K, D)  f32 out
    x = x_ref[...].astype(compute_dtype)                        # (bt, S, D)
    w = w_ref[...]                                              # (K, D)
    m = mask_ref[...]                                           # (bt, 1, S)

    bt = x.shape[0]
    wb = jnp.broadcast_to(w[None], (bt,) + w.shape)             # (bt, K, D)

    # scores[b,k,s] = sum_d w[k,d] * x[b,s,d]  (MXU, f32 accumulate)
    scores = jnp.einsum("bkd,bsd->bks", wb, x,
                        preferred_element_type=jnp.float32)     # (bt, K, S)

    # Exact masked_fill semantics (fully-masked rows -> uniform softmax).
    scores = jnp.where(m == 0.0, _MASK_FILL, scores)

    # Softmax over the sequence (lane) axis, f32, exact normalization.
    s_max = jnp.max(scores, axis=-1, keepdims=True)
    e = jnp.exp(scores - s_max)
    attn = e / jnp.sum(e, axis=-1, keepdims=True)               # (bt, K, S)

    # Context vectors: batched (K,S) @ (S,D) on the MXU, f32 accumulate.
    ctx = jnp.einsum("bks,bsd->bkd", attn.astype(compute_dtype), x,
                     preferred_element_type=jnp.float32)        # (bt, K, D)

    attn_ref[...] = attn.astype(attn_ref.dtype)
    ctx_ref[...] = ctx.astype(ctx_ref.dtype)


@functools.partial(jax.jit, static_argnames=("compute_dtype",))
def attention_concepts(input_, weights, mask=None, *, compute_dtype=jnp.bfloat16):
    """
    input_:  (B, S, D)
    weights: (K, D)   stacked Linear(D, 1, bias=False) weights
    mask:    (B, S) or None (nonzero = keep)
    returns: attn_weight (B, K, S) f32, attn_ctx_vec (B, K, D) f32
    """
    B, S, D = input_.shape
    K, Dw = weights.shape
    assert D == Dw

    x_b = jnp.dtype(input_.dtype).itemsize
    c_b = jnp.dtype(compute_dtype).itemsize

    # Weights / mask are tiny secondary streams; prepare them in the wrapper.
    w_c = weights.astype(compute_dtype)
    if mask is None:
        mask3 = jnp.ones((B, 1, S), dtype=jnp.float32)
    else:
        mask3 = mask.astype(jnp.float32).reshape(B, 1, S)

    # ---- generation-aware VMEM limit (128 MiB v5e/v6e, 64 MiB v7x) ----
    try:
        vmem_cap = int(pltpu.get_tpu_info().vmem_capacity_bytes)
    except Exception:
        vmem_cap = 64 * 1024 * 1024  # conservative fallback (v7x per-core)
    vmem_limit = max(32 * 1024 * 1024, min((vmem_cap * 3) // 4, 100 * 1024 * 1024))

    # ---- per-batch-element VMEM cost, incl. in-kernel f32 temporaries ----
    per_b = (
        2 * _tile_bytes(S, D, x_b)                             # x block (double-buffered)
        + (0 if x_b == c_b else _tile_bytes(S, D, c_b))        # in-kernel cast copy
        + 2 * _tile_bytes(1, S, 4)                             # mask block
        + 2 * _tile_bytes(K, S, 4)                             # attn out block
        + 2 * _tile_bytes(K, D, 4)                             # ctx out block
        + 3 * _tile_bytes(K, S, 4)                             # scores / exp / attn temps
        + _tile_bytes(K, S, c_b)                               # attn cast for ctx matmul
        + _tile_bytes(K, D, c_b)                               # broadcast weight copy
    )
    fixed = 2 * _tile_bytes(K, D, c_b)                         # weights block
    block_budget = int(vmem_limit * 0.8) - fixed
    bt_budget = max(1, block_budget // per_b)

    # Largest divisor of B within budget -> no batch padding, no wasted DMA.
    bt = 1
    for cand in range(1, B + 1):
        if B % cand == 0 and cand <= bt_budget:
            bt = cand
    # TODO(synk): add an inner "arbitrary" S-tiling axis with an online-softmax
    # accumulator for shapes where even a single (S, D) slab exceeds the
    # per-step VMEM budget (relevant on v7x's 64 MiB VMEM).

    cost = pl.CostEstimate(
        flops=int(4 * B * K * S * D),
        transcendentals=int(B * K * S),
        bytes_accessed=int(B * S * D * x_b + K * D * c_b
                           + B * S * 4 + B * K * S * 4 + B * K * D * 4),
    )

    attn, ctx = pl.pallas_call(
        functools.partial(_attn_concepts_kernel, compute_dtype=compute_dtype),
        out_shape=(
            jax.ShapeDtypeStruct((B, K, S), jnp.float32),
            jax.ShapeDtypeStruct((B, K, D), jnp.float32),
        ),
        grid=(B // bt,),
        in_specs=[
            # Full-extent S/D (and K) block dims are legal regardless of the
            # (8,128) divisibility rule, so no wrapper-side padding of x.
            pl.BlockSpec((bt, S, D), lambda i: (i, 0, 0)),   # x (native dtype)
            pl.BlockSpec((K, D), lambda i: (0, 0)),          # weights
            pl.BlockSpec((bt, 1, S), lambda i: (i, 0, 0)),   # mask
        ],
        out_specs=[
            pl.BlockSpec((bt, K, S), lambda i: (i, 0, 0)),   # attn weights
            pl.BlockSpec((bt, K, D), lambda i: (i, 0, 0)),   # context vectors
        ],
        compiler_params=pltpu.CompilerParams(
            dimension_semantics=("parallel",),
            vmem_limit_bytes=int(vmem_limit),
        ),
        cost_estimate=cost,
    )(input_, w_c, mask3)

    return attn, ctx


def _reference(input_, weights, mask=None):
    # Pure-JAX reference mirroring the PyTorch forward (f32, full precision).
    scores = jnp.einsum("bsd,kd->bks", input_, weights,
                        precision=jax.lax.Precision.HIGHEST)
    if mask is not None:
        scores = jnp.where(mask[:, None, :] == 0, _MASK_FILL, scores)
    attn = jax.nn.softmax(scores, axis=-1)
    ctx = jnp.einsum("bks,bsd->bkd", attn, input_,
                     precision=jax.lax.Precision.HIGHEST)
    return attn, ctx


if __name__ == "__main__":
    key = jax.random.PRNGKey(0)
    B, S, D, K = 2, 8, 32, 4  # batch, seq, input_size, n_concepts

    k_x, k_w = jax.random.split(key, 2)
    x = jax.random.normal(k_x, (B, S, D), dtype=jnp.float32)
    w = jax.random.normal(k_w, (K, D), dtype=jnp.float32) * 0.1
    mask = jnp.ones((B, S), dtype=jnp.float32)
    mask = mask.at[1, -2:].set(0.0)

    # f32 compute path.  Tolerance covers the TPU MXU's default bf16-pass
    # handling of f32 matmuls inside the kernel.
    ref_attn, ref_ctx = _reference(x, w, mask)
    a32, c32 = attention_concepts(x, w, mask, compute_dtype=jnp.float32)
    jax.block_until_ready((a32, c32))
    assert a32.shape == (B, K, S) and c32.shape == (B, K, D)
    assert jnp.allclose(a32, ref_attn, atol=1e-2, rtol=1e-2)
    assert jnp.allclose(c32, ref_ctx, atol=1e-2, rtol=1e-2)

    # bf16 MXU path (default): halves x-read bytes once upstream emits bf16,
    # softmax and both matmul accumulations stay f32.
    a16, c16 = attention_concepts(x, w, mask)
    jax.block_until_ready((a16, c16))
    assert jnp.allclose(a16, ref_attn, atol=5e-2, rtol=5e-2)
    assert jnp.allclose(c16, ref_ctx, atol=5e-2, rtol=5e-2)

    # mask=None path.
    ref_attn_nm, ref_ctx_nm = _reference(x, w, None)
    a_nm, c_nm = attention_concepts(x, w, None, compute_dtype=jnp.float32)
    jax.block_until_ready((a_nm, c_nm))
    assert jnp.allclose(a_nm, ref_attn_nm, atol=1e-2, rtol=1e-2)
    assert jnp.allclose(c_nm, ref_ctx_nm, atol=1e-2, rtol=1e-2)

    # Fully-masked row: must degenerate to uniform over ALL positions,
    # exactly like torch's masked_fill(-1e9) + softmax.
    mask_full = jnp.ones((B, S), dtype=jnp.float32).at[0, :].set(0.0)
    ref_attn_f, ref_ctx_f = _reference(x, w, mask_full)
    a_f, c_f = attention_concepts(x, w, mask_full, compute_dtype=jnp.float32)
    jax.block_until_ready((a_f, c_f))
    assert jnp.allclose(a_f, ref_attn_f, atol=1e-2, rtol=1e-2)
    assert jnp.allclose(c_f, ref_ctx_f, atol=1e-2, rtol=1e-2)

    print("KERNEL_OK")
</pallas_src>

<mosaic_0001>
module attributes {stable_mosaic.version = 11 : i64} {
  func.func @_attn_concepts_kernel(%arg0: i32, %arg1: memref<2x8x32xf32, #tpu.memory_space<vmem>>, %arg2: memref<4x32xf32, #tpu.memory_space<vmem>>, %arg3: memref<2x1x8xf32, #tpu.memory_space<vmem>>, %arg4: memref<2x4x8xf32, #tpu.memory_space<vmem>>, %arg5: memref<2x4x32xf32, #tpu.memory_space<vmem>>) attributes {dimension_semantics = [#tpu.dimension_semantics<parallel>], iteration_bounds = array<i64: 1>, scalar_prefetch = 0 : i64, scratch_operands = 0 : i64, tpu.core_type = #tpu.core_type<tc>, window_params = [{transform_indices = @transform_0, window_bounds = array<i64: 2, 8, 32>}, {pipeline_mode = #tpu.pipeline_mode<synchronous>, transform_indices = @transform_1, window_bounds = array<i64: 4, 32>}, {transform_indices = @transform_2, window_bounds = array<i64: 2, 1, 8>}, {transform_indices = @transform_3, window_bounds = array<i64: 2, 4, 8>}, {transform_indices = @transform_4, window_bounds = array<i64: 2, 4, 32>}]} {
    %c0 = arith.constant 0 : index
    %c0_0 = arith.constant 0 : index
    %c0_1 = arith.constant 0 : index
    %0 = vector.load %arg1[%c0, %c0_0, %c0_1] : memref<2x8x32xf32, #tpu.memory_space<vmem>>, vector<2x8x32xf32>
    %c0_2 = arith.constant 0 : index
    %c0_3 = arith.constant 0 : index
    %1 = vector.load %arg2[%c0_2, %c0_3] : memref<4x32xf32, #tpu.memory_space<vmem>>, vector<4x32xf32>
    %c0_4 = arith.constant 0 : index
    %c0_5 = arith.constant 0 : index
    %c0_6 = arith.constant 0 : index
    %2 = vector.load %arg3[%c0_4, %c0_5, %c0_6] : memref<2x1x8xf32, #tpu.memory_space<vmem>>, vector<2x1x8xf32>
    %3 = vector.shape_cast %1 : vector<4x32xf32> to vector<1x4x32xf32>
    %4 = vector.shape_cast %3 : vector<1x4x32xf32> to vector<1x4x32xf32>
    %5 = vector.broadcast %4 : vector<1x4x32xf32> to vector<2x4x32xf32>
    "tpu.trace_start"() <{level = 10 : i32, message = "bkd,bsd->bks"}> : () -> ()
    %cst = arith.constant dense<0.000000e+00> : vector<2x4x8xf32>
    %6 = tpu.matmul %5, %0, %cst {dimension_numbers = #tpu.dot_dimension_numbers<[2], [2], [1], [1], [0, 0, 0, 1, 1, 1], [0], [0]>} : vector<2x4x32xf32>, vector<2x8x32xf32>, vector<2x4x8xf32> -> vector<2x4x8xf32>
    %cst_7 = arith.constant 0.000000e+00 : f32
    "tpu.trace_stop"() : () -> ()
    %7 = vector.broadcast %cst_7 : f32 to vector<2x1x8xf32>
    %8 = arith.cmpf oeq, %2, %7 : vector<2x1x8xf32>
    %cst_8 = arith.constant -1.000000e+09 : f32
    %9 = vector.shape_cast %8 : vector<2x1x8xi1> to vector<2x1x8xi1>
    %10 = vector.broadcast %9 : vector<2x1x8xi1> to vector<2x4x8xi1>
    %11 = vector.broadcast %cst_8 : f32 to vector<2x4x8xf32>
    %12 = arith.select %10, %11, %6 : vector<2x4x8xi1>, vector<2x4x8xf32>
    %cst_9 = arith.constant dense<0xFF800000> : vector<2x4xf32>
    %13 = vector.multi_reduction <maximumf>, %12, %cst_9 [2] : vector<2x4x8xf32> to vector<2x4xf32>
    %14 = vector.shape_cast %13 : vector<2x4xf32> to vector<2x4x1xf32>
    %15 = vector.broadcast %14 : vector<2x4x1xf32> to vector<2x4x8xf32>
    %16 = arith.subf %12, %15 : vector<2x4x8xf32>
    %17 = math.exp %16 : vector<2x4x8xf32>
    %cst_10 = arith.constant dense<0.000000e+00> : vector<2x4xf32>
    %18 = vector.multi_reduction <add>, %17, %cst_10 [2] : vector<2x4x8xf32> to vector<2x4xf32>
    %19 = vector.shape_cast %18 : vector<2x4xf32> to vector<2x4x1xf32>
    %20 = vector.broadcast %19 : vector<2x4x1xf32> to vector<2x4x8xf32>
    %21 = arith.divf %17, %20 : vector<2x4x8xf32>
    "tpu.trace_start"() <{level = 10 : i32, message = "bks,bsd->bkd"}> : () -> ()
    %cst_11 = arith.constant dense<0.000000e+00> : vector<2x4x32xf32>
    %22 = tpu.matmul %21, %0, %cst_11 {dimension_numbers = #tpu.dot_dimension_numbers<[2], [1], [1], [2], [0, 0, 0, 1, 1, 2], [0], [0]>} : vector<2x4x8xf32>, vector<2x8x32xf32>, vector<2x4x32xf32> -> vector<2x4x32xf32>
    "tpu.trace_stop"() : () -> ()
    %c0_12 = arith.constant 0 : index
    %c0_13 = arith.constant 0 : index
    %c0_14 = arith.constant 0 : index
    %23 = vector.load %arg4[%c0_12, %c0_13, %c0_14] : memref<2x4x8xf32, #tpu.memory_space<vmem>>, vector<2x4x8xf32>
    tpu.vector_store %arg4[%c0_12, %c0_13, %c0_14], %21 {strides = array<i32>} : memref<2x4x8xf32, #tpu.memory_space<vmem>>, vector<2x4x8xf32>,
    %c0_15 = arith.constant 0 : index
    %c0_16 = arith.constant 0 : index
    %c0_17 = arith.constant 0 : index
    %24 = vector.load %arg5[%c0_15, %c0_16, %c0_17] : memref<2x4x32xf32, #tpu.memory_space<vmem>>, vector<2x4x32xf32>
    tpu.vector_store %arg5[%c0_15, %c0_16, %c0_17], %22 {strides = array<i32>} : memref<2x4x32xf32, #tpu.memory_space<vmem>>, vector<2x4x32xf32>,
    return
  }
  func.func @transform_0(%arg0: i32) -> (i32, i32, i32) {
    %c0_i32 = arith.constant 0 : i32
    %c0_i32_0 = arith.constant 0 : i32
    %c0_i32_1 = arith.constant 0 : i32
    return %arg0, %c0_i32, %c0_i32_0 : i32, i32, i32
  }
  func.func @transform_1(%arg0: i32) -> (i32, i32) {
    %c0_i32 = arith.constant 0 : i32
    %c0_i32_0 = arith.constant 0 : i32
    %c0_i32_1 = arith.constant 0 : i32
    return %c0_i32, %c0_i32_0 : i32, i32
  }
  func.func @transform_2(%arg0: i32) -> (i32, i32, i32) {
    %c0_i32 = arith.constant 0 : i32
    %c0_i32_0 = arith.constant 0 : i32
    %c0_i32_1 = arith.constant 0 : i32
    return %arg0, %c0_i32, %c0_i32_0 : i32, i32, i32
  }
  func.func @transform_3(%arg0: i32) -> (i32, i32, i32) {
    %c0_i32 = arith.constant 0 : i32
    %c0_i32_0 = arith.constant 0 : i32
    %c0_i32_1 = arith.constant 0 : i32
    return %arg0, %c0_i32, %c0_i32_0 : i32, i32, i32
  }
  func.func @transform_4(%arg0: i32) -> (i32, i32, i32) {
    %c0_i32 = arith.constant 0 : i32
    %c0_i32_0 = arith.constant 0 : i32
    %c0_i32_1 = arith.constant 0 : i32
    return %arg0, %c0_i32, %c0_i32_0 : i32, i32, i32
  }
}

</mosaic_0001>

<llo_original>
// kernel: attention_concepts.1
$region0: #{attention_concepts.1}
  #allocation0 [shape = 'u32[]', space=smem, size = 0x4, offset = 0x4, fixed_abs, tag = 'smem constant byte address 0x4 - core index']
  #allocation1 [shape = 'u32[144,128]{1,0:T(1,128)}', space=vmem, size = 0x12000, scoped, tag = 'internal scratch']
  %s0 = inlined_call_operand.hbm [shape: f32[2,8,32], index: 0, kind: input, shape index: {}]
  %s1 = inlined_call_operand.hbm [shape: f32[4,32], index: 1, kind: input, shape index: {}]
  %s2 = inlined_call_operand.vmem [shape: f32[2,1,8], index: 2, kind: input, shape index: {}]
  %s3 = inlined_call_operand.hbm [shape: f32[2,4,8], index: 3, kind: output, shape index: {0}]
  %s4 = inlined_call_operand.hbm [shape: f32[2,4,32], index: 4, kind: output, shape index: {1}]
  %5 = xla_tuple %s3, %s4
  %s6 = sld [smem:[#allocation0]]
  $region38: #{attention_concepts.1} parent=0
    _
  %s8 = ssub.s32 1, %s6
  %s9 = scalar_select 0, %s8, %s6
  $region1: #{attention_concepts.1} parent=0
    #allocation2 [shape = 'u8[8192]{0}', space=vmem, size = 0x2000, scoped, tag = 'input window, operand 0, single buffered']
    #allocation3 [shape = 's32[1]{0}', space=sflag, size = 0x4, scoped, tag = 'scoped memory for attention_concepts.1']
    #allocation4 [shape = 's32[1]{0}', space=sflag, size = 0x4, scoped, tag = 'scoped memory for attention_concepts.1']
    #allocation5 [shape = 'u8[2048]{0}', space=vmem, size = 0x800, scoped, tag = 'input window, operand 1, single buffered']
    #allocation6 [shape = 's32[1]{0}', space=sflag, size = 0x4, scoped, tag = 'scoped memory for attention_concepts.1']
    #allocation7 [shape = 'u8[4096]{0}', space=vmem, size = 0x1000, scoped, tag = 'output window, operand 0, single buffered']
    #allocation8 [shape = 'u8[4096]{0}', space=vmem, size = 0x1000, scoped, tag = 'output window, operand 1, single buffered']
    #allocation9 [shape = 's32[1]{0}', space=sflag, size = 0x4, scoped, tag = 'scoped memory for attention_concepts.1']
    %10 = vsyncpa [#allocation3], 0
    %11 = vsyncpa [#allocation6], 0
    %12 = vsyncpa [#allocation4], 0
    %13 = vsyncpa [#allocation9], 0
    // Predicated region
    $region2: #{attention_concepts.1} parent=1 // pred_check
      _
    $region3: #{attention_concepts.1} parent=1 // pred_check_branch
      %15 = sbr.rel (0) target = $region5
    $region4: #{attention_concepts.1} parent=1 // pred_region
      %s17 = ssub.s32 256, 256
      %18 = vsyncadd [#allocation3], %s17
      %s19 = sshll.u32 [#allocation2], 4
      %s20 = int_to_ptr.vmem [resolvable:$true] %s19
      %25 = dma.hbm_to_vmem [thread:$0]  %s0, 256, %s20, [#allocation3], 128, 128, 8
    $region5: #{attention_concepts.1} parent=1 // pred_fallthru
      _
    // Predicated region
    $region6: #{attention_concepts.1} parent=1 // pred_check
      _
    $region7: #{attention_concepts.1} parent=1 // pred_check_branch
      %27 = sbr.rel (0) target = $region9
    $region8: #{attention_concepts.1} parent=1 // pred_region
      %s29 = ssub.s32 64, 64
      %30 = vsyncadd [#allocation6], %s29
      %s32 = sshll.u32 [#allocation5], 4
      %s33 = int_to_ptr.vmem [resolvable:$true] %s32
      %35 = dma.hbm_to_vmem [thread:$0]  %s1, 64, %s33, [#allocation6]
    $region9: #{attention_concepts.1} parent=1 // pred_fallthru
      _
    // Predicated region
    $region10: #{attention_concepts.1} parent=1 // pred_check
      _
    $region11: #{attention_concepts.1} parent=1 // pred_check_branch
      %37 = sbr.rel (0) target = $region13
    $region12: #{attention_concepts.1} parent=1 // pred_region
      _
    $region13: #{attention_concepts.1} parent=1 // pred_fallthru
      _
    // Predicated region
    $region14: #{attention_concepts.1} parent=1 // pred_check
      _
    $region15: #{attention_concepts.1} parent=1 // pred_check_branch
      %39 = sbr.rel (0) target = $region17
    $region16: #{attention_concepts.1} parent=1 // pred_region
      %40 = dma.done [#allocation3], 256
    $region17: #{attention_concepts.1} parent=1 // pred_fallthru
      _
    // Predicated region
    $region18: #{attention_concepts.1} parent=1 // pred_check
      _
    $region19: #{attention_concepts.1} parent=1 // pred_check_branch
      %42 = sbr.rel (0) target = $region21
    $region20: #{attention_concepts.1} parent=1 // pred_region
      %43 = dma.done [#allocation6], 64
    $region21: #{attention_concepts.1} parent=1 // pred_fallthru
      _
    %v44 = vld [vmem:[#allocation2] sm:$0xff]
    %v45 = vld [vmem:[#allocation2 + $0x8] sm:$0xff]
    %v46 = vld [vmem:[#allocation5] sm:$0xf]
    %v47 = vld [vmem:[%s2] sm:$0x1]
    %v48 = vld [vmem:[%s2 + $0x1] sm:$0x1]
    %vm49 = vcmask 261120
    %v51 = vsel %vm49, %v46, 0
    %v54 = vsel %vm49, %v44, 0
    %56 = vmatprep.subr.mxu0 0.0
    %57 = vmatpush1.xpose.msra.mxu0 0.0
    %58 = vmatprep.subr.mxu0 0.0
    %59 = vmatpush1.xpose.msra.mxu0 0.0
    %60 = vmatprep.subr.mxu0 0.0
    %61 = vmatpush1.xpose.msra.mxu0 0.0
    %62 = vmatprep.subr.mxu0 0.0
    %63 = vmatpush1.xpose.msra.mxu0 0.0
    %64 = vmatprep.subr.mxu0 0.0
    %65 = vmatpush1.xpose.msra.mxu0 0.0
    %66 = vmatprep.subr.mxu0 0.0
    %67 = vmatpush1.xpose.msra.mxu0 0.0
    %68 = vmatprep.subr.mxu0 0.0
    %69 = vmatpush1.xpose.msra.mxu0 0.0
    %70 = vmatprep.subr.mxu0 0.0
    %71 = vmatpush1.xpose.msra.mxu0 0.0
    %72 = vmatprep.subr.mxu0 0.0
    %73 = vmatpush1.xpose.msra.mxu0 0.0
    %74 = vmatprep.subr.mxu0 0.0
    %75 = vmatpush1.xpose.msra.mxu0 0.0
    %76 = vmatprep.subr.mxu0 0.0
    %77 = vmatpush1.xpose.msra.mxu0 0.0
    %78 = vmatprep.subr.mxu0 0.0
    %79 = vmatpush1.xpose.msra.mxu0 0.0
    %80 = vmatprep.subr.mxu0 0.0
    %81 = vmatpush1.xpose.msra.mxu0 0.0
    %82 = vmatprep.subr.mxu0 0.0
    %83 = vmatpush1.xpose.msra.mxu0 0.0
    %84 = vmatprep.subr.mxu0 0.0
    %85 = vmatpush1.xpose.msra.mxu0 0.0
    %86 = vmatprep.subr.mxu0 0.0
    %87 = vmatpush1.xpose.msra.mxu0 %v54
    %88 = vmatprep.subr.mxu0 0.0
    %89 = vmatpush2.xpose.msra.mxu0 0.0
    %90 = vmatprep.subr.mxu0 0.0
    %91 = vmatpush2.xpose.msra.mxu0 0.0
    %92 = vmatprep.subr.mxu0 0.0
    %93 = vmatpush2.xpose.msra.mxu0 0.0
    %94 = vmatprep.subr.mxu0 0.0
    %95 = vmatpush2.xpose.msra.mxu0 0.0
    %96 = vmatprep.subr.mxu0 0.0
    %97 = vmatpush2.xpose.msra.mxu0 0.0
    %98 = vmatprep.subr.mxu0 0.0
    %99 = vmatpush2.xpose.msra.mxu0 0.0
    %100 = vmatprep.subr.mxu0 0.0
    %101 = vmatpush2.xpose.msra.mxu0 0.0
    %102 = vmatprep.subr.mxu0 0.0
    %103 = vmatpush2.xpose.msra.mxu0 0.0
    %104 = vmatprep.subr.mxu0 0.0
    %105 = vmatpush2.xpose.msra.mxu0 0.0
    %106 = vmatprep.subr.mxu0 0.0
    %107 = vmatpush2.xpose.msra.mxu0 0.0
    %108 = vmatprep.subr.mxu0 0.0
    %109 = vmatpush2.xpose.msra.mxu0 0.0
    %110 = vmatprep.subr.mxu0 0.0
    %111 = vmatpush2.xpose.msra.mxu0 0.0
    %112 = vmatprep.subr.mxu0 0.0
    %113 = vmatpush2.xpose.msra.mxu0 0.0
    %114 = vmatprep.subr.mxu0 0.0
    %115 = vmatpush2.xpose.msra.mxu0 0.0
    %116 = vmatprep.subr.mxu0 0.0
    %117 = vmatpush2.xpose.msra.mxu0 0.0
    %118 = vmatprep.subr.mxu0 0.0
    %119 = vmatpush2.xpose.msra.mxu0 0.0
    %120 = vmatprep.mubr.f32.mxu0 0.0
    %121 = vmatmul.mubr.f32.gmra.mxu0 %v51
    %v122 = vpop.f32.mrf.mxu0
    %v123 = vadd.f32 0.0, %v122
    %v124 = vpop.f32.mrf.mxu0
    %125 = vdwg.mxu0
    %v127 = vsel %vm49, %v45, 0
    %129 = vmatprep.subr.mxu0 0.0
    %130 = vmatpush1.xpose.msra.mxu0 0.0
    %131 = vmatprep.subr.mxu0 0.0
    %132 = vmatpush1.xpose.msra.mxu0 0.0
    %133 = vmatprep.subr.mxu0 0.0
    %134 = vmatpush1.xpose.msra.mxu0 0.0
    %135 = vmatprep.subr.mxu0 0.0
    %136 = vmatpush1.xpose.msra.mxu0 0.0
    %137 = vmatprep.subr.mxu0 0.0
    %138 = vmatpush1.xpose.msra.mxu0 0.0
    %139 = vmatprep.subr.mxu0 0.0
    %140 = vmatpush1.xpose.msra.mxu0 0.0
    %141 = vmatprep.subr.mxu0 0.0
    %142 = vmatpush1.xpose.msra.mxu0 0.0
    %143 = vmatprep.subr.mxu0 0.0
    %144 = vmatpush1.xpose.msra.mxu0 0.0
    %145 = vmatprep.subr.mxu0 0.0
    %146 = vmatpush1.xpose.msra.mxu0 0.0
    %147 = vmatprep.subr.mxu0 0.0
    %148 = vmatpush1.xpose.msra.mxu0 0.0
    %149 = vmatprep.subr.mxu0 0.0
    %150 = vmatpush1.xpose.msra.mxu0 0.0
    %151 = vmatprep.subr.mxu0 0.0
    %152 = vmatpush1.xpose.msra.mxu0 0.0
    %153 = vmatprep.subr.mxu0 0.0
    %154 = vmatpush1.xpose.msra.mxu0 0.0
    %155 = vmatprep.subr.mxu0 0.0
    %156 = vmatpush1.xpose.msra.mxu0 0.0
    %157 = vmatprep.subr.mxu0 0.0
    %158 = vmatpush1.xpose.msra.mxu0 0.0
    %159 = vmatprep.subr.mxu0 0.0
    %160 = vmatpush1.xpose.msra.mxu0 %v127
    %161 = vmatprep.subr.mxu0 0.0
    %162 = vmatpush2.xpose.msra.mxu0 0.0
    %163 = vmatprep.subr.mxu0 0.0
    %164 = vmatpush2.xpose.msra.mxu0 0.0
    %165 = vmatprep.subr.mxu0 0.0
    %166 = vmatpush2.xpose.msra.mxu0 0.0
    %167 = vmatprep.subr.mxu0 0.0
    %168 = vmatpush2.xpose.msra.mxu0 0.0
    %169 = vmatprep.subr.mxu0 0.0
    %170 = vmatpush2.xpose.msra.mxu0 0.0
    %171 = vmatprep.subr.mxu0 0.0
    %172 = vmatpush2.xpose.msra.mxu0 0.0
    %173 = vmatprep.subr.mxu0 0.0
    %174 = vmatpush2.xpose.msra.mxu0 0.0
    %175 = vmatprep.subr.mxu0 0.0
    %176 = vmatpush2.xpose.msra.mxu0 0.0
    %177 = vmatprep.subr.mxu0 0.0
    %178 = vmatpush2.xpose.msra.mxu0 0.0
    %179 = vmatprep.subr.mxu0 0.0
    %180 = vmatpush2.xpose.msra.mxu0 0.0
    %181 = vmatprep.subr.mxu0 0.0
    %182 = vmatpush2.xpose.msra.mxu0 0.0
    %183 = vmatprep.subr.mxu0 0.0
    %184 = vmatpush2.xpose.msra.mxu0 0.0
    %185 = vmatprep.subr.mxu0 0.0
    %186 = vmatpush2.xpose.msra.mxu0 0.0
    %187 = vmatprep.subr.mxu0 0.0
    %188 = vmatpush2.xpose.msra.mxu0 0.0
    %189 = vmatprep.subr.mxu0 0.0
    %190 = vmatpush2.xpose.msra.mxu0 0.0
    %191 = vmatprep.subr.mxu0 0.0
    %192 = vmatpush2.xpose.msra.mxu0 0.0
    %193 = vmatprep.mubr.f32.mxu0 0.0
    %194 = vmatmul.mubr.f32.gmra.mxu0 %v51
    %v195 = vpop.f32.mrf.mxu0
    %v196 = vadd.f32 0.0, %v195
    %v197 = vpop.f32.mrf.mxu0
    %198 = vdwg.mxu0
    %vm199 = vcmp.eq.f32.partialorder %v47, 0.0
    %vm200 = vcmp.eq.f32.partialorder %v48, 0.0
    %v201 = vsel %vm199, 1, 0
    %v202 = vsel %vm200, 1, 0
    %v203 = vlaneseq
    %v204 = vshrl.u32 %v203, 7
    %v205 = vsub.s32 0, %v204
    %v206 = vrot.slane %v201, %v205
    %v207 = vlaneseq
    %v208 = vshrl.u32 %v207, 7
    %v209 = vsub.s32 0, %v208
    %v210 = vrot.slane %v202, %v209
    %vm211 = vcmp.eq.s32.totalorder %v206, 1
    %vm212 = vcmp.eq.s32.totalorder %v210, 1
    %v213 = vsel %vm211, -1e+09, %v123
    %v214 = vsel %vm212, -1e+09, %v196
    %vm215 = vcmask 60416
    %v216 = vsel %vm215, %v213, -inf
    %217 = vmax.xlane.f32.xlu0 %v216
    %v218 = vpop.xlane.xlu0 %217
    %v219 = vsel %vm215, %v214, -inf
    %220 = vmax.xlane.f32.xlu0 %v219
    %v221 = vpop.xlane.xlu0 %220
    %v222 = vsub.f32 %v213, %v218
    %v223 = vsub.f32 %v214, %v221
    %v224 = vmul.f32 %v222, 1.442695
    %v225 = vpow.pop %v224
    %v226 = vmul.f32 %v223, 1.442695
    %v227 = vpow.pop %v226
    %v228 = vsel %vm215, %v225, 0.0
    %229 = vadd.xlane.f32.xlu0 %v228
    %v230 = vpop.xlane.xlu0 %229
    %v231 = vsel %vm215, %v227, 0.0
    %232 = vadd.xlane.f32.xlu0 %v231
    %v233 = vpop.xlane.xlu0 %232
    %v234 = vrcp.pop %v230
    %v235 = vmul.f32 %v225, %v234
    %v236 = vrcp.pop %v233
    %v237 = vmul.f32 %v227, %v236
    %vm238 = vcmask 64512
    %v240 = vsel %vm238, %v235, 0
    %242 = vmatprep.subr.mxu0 0.0
    %243 = vmatpush1.msra.mxu0 0.0
    %244 = vmatprep.subr.mxu0 0.0
    %245 = vmatpush1.msra.mxu0 0.0
    %246 = vmatprep.subr.mxu0 0.0
    %247 = vmatpush1.msra.mxu0 0.0
    %248 = vmatprep.subr.mxu0 0.0
    %249 = vmatpush1.msra.mxu0 0.0
    %250 = vmatprep.subr.mxu0 0.0
    %251 = vmatpush1.msra.mxu0 0.0
    %252 = vmatprep.subr.mxu0 0.0
    %253 = vmatpush1.msra.mxu0 0.0
    %254 = vmatprep.subr.mxu0 0.0
    %255 = vmatpush1.msra.mxu0 0.0
    %256 = vmatprep.subr.mxu0 0.0
    %257 = vmatpush1.msra.mxu0 0.0
    %258 = vmatprep.subr.mxu0 0.0
    %259 = vmatpush1.msra.mxu0 0.0
    %260 = vmatprep.subr.mxu0 0.0
    %261 = vmatpush1.msra.mxu0 0.0
    %262 = vmatprep.subr.mxu0 0.0
    %263 = vmatpush1.msra.mxu0 0.0
    %264 = vmatprep.subr.mxu0 0.0
    %265 = vmatpush1.msra.mxu0 0.0
    %266 = vmatprep.subr.mxu0 0.0
    %267 = vmatpush1.msra.mxu0 0.0
    %268 = vmatprep.subr.mxu0 0.0
    %269 = vmatpush1.msra.mxu0 0.0
    %270 = vmatprep.subr.mxu0 0.0
    %271 = vmatpush1.msra.mxu0 0.0
    %272 = vmatprep.subr.mxu0 0.0
    %273 = vmatpush1.msra.mxu0 %v44
    %274 = vmatprep.subr.mxu0 0.0
    %275 = vmatpush2.msra.mxu0 0.0
    %276 = vmatprep.subr.mxu0 0.0
    %277 = vmatpush2.msra.mxu0 0.0
    %278 = vmatprep.subr.mxu0 0.0
    %279 = vmatpush2.msra.mxu0 0.0
    %280 = vmatprep.subr.mxu0 0.0
    %281 = vmatpush2.msra.mxu0 0.0
    %282 = vmatprep.subr.mxu0 0.0
    %283 = vmatpush2.msra.mxu0 0.0
    %284 = vmatprep.subr.mxu0 0.0
    %285 = vmatpush2.msra.mxu0 0.0
    %286 = vmatprep.subr.mxu0 0.0
    %287 = vmatpush2.msra.mxu0 0.0
    %288 = vmatprep.subr.mxu0 0.0
    %289 = vmatpush2.msra.mxu0 0.0
    %290 = vmatprep.subr.mxu0 0.0
    %291 = vmatpush2.msra.mxu0 0.0
    %292 = vmatprep.subr.mxu0 0.0
    %293 = vmatpush2.msra.mxu0 0.0
    %294 = vmatprep.subr.mxu0 0.0
    %295 = vmatpush2.msra.mxu0 0.0
    %296 = vmatprep.subr.mxu0 0.0
    %297 = vmatpush2.msra.mxu0 0.0
    %298 = vmatprep.subr.mxu0 0.0
    %299 = vmatpush2.msra.mxu0 0.0
    %300 = vmatprep.subr.mxu0 0.0
    %301 = vmatpush2.msra.mxu0 0.0
    %302 = vmatprep.subr.mxu0 0.0
    %303 = vmatpush2.msra.mxu0 0.0
    %304 = vmatprep.subr.mxu0 0.0
    %305 = vmatpush2.msra.mxu0 0.0
    %306 = vmatprep.mubr.f32.mxu0 0.0
    %307 = vmatmul.mubr.f32.gmra.mxu0 %v240
    %v308 = vpop.f32.mrf.mxu0
    %v309 = vadd.f32 0.0, %v308
    %v310 = vpop.f32.mrf.mxu0
    %311 = vdwg.mxu0
    %v313 = vsel %vm238, %v237, 0
    %315 = vmatprep.subr.mxu0 0.0
    %316 = vmatpush1.msra.mxu0 0.0
    %317 = vmatprep.subr.mxu0 0.0
    %318 = vmatpush1.msra.mxu0 0.0
    %319 = vmatprep.subr.mxu0 0.0
    %320 = vmatpush1.msra.mxu0 0.0
    %321 = vmatprep.subr.mxu0 0.0
    %322 = vmatpush1.msra.mxu0 0.0
    %323 = vmatprep.subr.mxu0 0.0
    %324 = vmatpush1.msra.mxu0 0.0
    %325 = vmatprep.subr.mxu0 0.0
    %326 = vmatpush1.msra.mxu0 0.0
    %327 = vmatprep.subr.mxu0 0.0
    %328 = vmatpush1.msra.mxu0 0.0
    %329 = vmatprep.subr.mxu0 0.0
    %330 = vmatpush1.msra.mxu0 0.0
    %331 = vmatprep.subr.mxu0 0.0
    %332 = vmatpush1.msra.mxu0 0.0
    %333 = vmatprep.subr.mxu0 0.0
    %334 = vmatpush1.msra.mxu0 0.0
    %335 = vmatprep.subr.mxu0 0.0
    %336 = vmatpush1.msra.mxu0 0.0
    %337 = vmatprep.subr.mxu0 0.0
    %338 = vmatpush1.msra.mxu0 0.0
    %339 = vmatprep.subr.mxu0 0.0
    %340 = vmatpush1.msra.mxu0 0.0
    %341 = vmatprep.subr.mxu0 0.0
    %342 = vmatpush1.msra.mxu0 0.0
    %343 = vmatprep.subr.mxu0 0.0
    %344 = vmatpush1.msra.mxu0 0.0
    %345 = vmatprep.subr.mxu0 0.0
    %346 = vmatpush1.msra.mxu0 %v45
    %347 = vmatprep.subr.mxu0 0.0
    %348 = vmatpush2.msra.mxu0 0.0
    %349 = vmatprep.subr.mxu0 0.0
    %350 = vmatpush2.msra.mxu0 0.0
    %351 = vmatprep.subr.mxu0 0.0
    %352 = vmatpush2.msra.mxu0 0.0
    %353 = vmatprep.subr.mxu0 0.0
    %354 = vmatpush2.msra.mxu0 0.0
    %355 = vmatprep.subr.mxu0 0.0
    %356 = vmatpush2.msra.mxu0 0.0
    %357 = vmatprep.subr.mxu0 0.0
    %358 = vmatpush2.msra.mxu0 0.0
    %359 = vmatprep.subr.mxu0 0.0
    %360 = vmatpush2.msra.mxu0 0.0
    %361 = vmatprep.subr.mxu0 0.0
    %362 = vmatpush2.msra.mxu0 0.0
    %363 = vmatprep.subr.mxu0 0.0
    %364 = vmatpush2.msra.mxu0 0.0
    %365 = vmatprep.subr.mxu0 0.0
    %366 = vmatpush2.msra.mxu0 0.0
    %367 = vmatprep.subr.mxu0 0.0
    %368 = vmatpush2.msra.mxu0 0.0
    %369 = vmatprep.subr.mxu0 0.0
    %370 = vmatpush2.msra.mxu0 0.0
    %371 = vmatprep.subr.mxu0 0.0
    %372 = vmatpush2.msra.mxu0 0.0
    %373 = vmatprep.subr.mxu0 0.0
    %374 = vmatpush2.msra.mxu0 0.0
    %375 = vmatprep.subr.mxu0 0.0
    %376 = vmatpush2.msra.mxu0 0.0
    %377 = vmatprep.subr.mxu0 0.0
    %378 = vmatpush2.msra.mxu0 0.0
    %379 = vmatprep.mubr.f32.mxu0 0.0
    %380 = vmatmul.mubr.f32.gmra.mxu0 %v313
    %v381 = vpop.f32.mrf.mxu0
    %v382 = vadd.f32 0.0, %v381
    %v383 = vpop.f32.mrf.mxu0
    %384 = vdwg.mxu0
    %385 = vst.msk [vmem:[#allocation7] sm:$0xf] %vm215, %v235
    %386 = vst.msk [vmem:[#allocation7 + $0x4] sm:$0xf] %vm215, %v237
    %vm387 = vcmask 257024
    %388 = vst.msk [vmem:[#allocation8] sm:$0xf] %vm387, %v309
    %389 = vst.msk [vmem:[#allocation8 + $0x4] sm:$0xf] %vm387, %v382
    // Predicated region
    $region22: #{attention_concepts.1} parent=1 // pred_check
      _
    $region23: #{attention_concepts.1} parent=1 // pred_check_branch
      %391 = sbr.rel (0) target = $region25
    $region24: #{attention_concepts.1} parent=1 // pred_region
      %s393 = ssub.s32 128, 128
      %394 = vsyncadd [#allocation4], %s393
      %s395 = sshll.u32 [#allocation7], 4
      %s396 = int_to_ptr.vmem [resolvable:$true] %s395
      %401 = dma.vmem_to_hbm [thread:$0]  %s396, 128, %s3, [#allocation4], 64, 64, 4
    $region25: #{attention_concepts.1} parent=1 // pred_fallthru
      _
    // Predicated region
    $region26: #{attention_concepts.1} parent=1 // pred_check
      _
    $region27: #{attention_concepts.1} parent=1 // pred_check_branch
      %403 = sbr.rel (0) target = $region29
    $region28: #{attention_concepts.1} parent=1 // pred_region
      %s405 = ssub.s32 128, 128
      %406 = vsyncadd [#allocation9], %s405
      %s407 = sshll.u32 [#allocation8], 4
      %s408 = int_to_ptr.vmem [resolvable:$true] %s407
      %413 = dma.vmem_to_hbm [thread:$0]  %s408, 128, %s4, [#allocation9], 64, 64, 4
    $region29: #{attention_concepts.1} parent=1 // pred_fallthru
      _
    // Predicated region
    $region30: #{attention_concepts.1} parent=1 // pred_check
      _
    $region31: #{attention_concepts.1} parent=1 // pred_check_branch
      %415 = sbr.rel (0) target = $region33
    $region32: #{attention_concepts.1} parent=1 // pred_region
      %416 = dma.done [#allocation4], 128
    $region33: #{attention_concepts.1} parent=1 // pred_fallthru
      _
    // Predicated region
    $region34: #{attention_concepts.1} parent=1 // pred_check
      _
    $region35: #{attention_concepts.1} parent=1 // pred_check_branch
      %418 = sbr.rel (0) target = $region37
    $region36: #{attention_concepts.1} parent=1 // pred_region
      %419 = dma.done [#allocation9], 128
    $region37: #{attention_concepts.1} parent=1 // pred_fallthru
      _
    %420 = vsyncpa [#allocation3], 1
    %421 = vsyncpa [#allocation6], 1
    %422 = vsyncpa [#allocation4], 1
    %423 = vsyncpa [#allocation9], 1

</llo_original>
